<compile_context>
chip_gen: v5e
topology: v5e:2x2
jax: 0.10.0
libtpu: 0.0.40
codegen_flags: <defaults>
</compile_context>

<pallas_src>
import functools

import jax
import jax.numpy as jnp
from jax.experimental import pallas as pl
from jax.experimental.pallas import tpu as pltpu

_EPS_DEFAULT = 1e-6          # DIoU1DLoss.__init__ default
_LANES = 128
_TILE_ROWS_MAX = 512         # 512*128 f32 = 256 KiB per stream per buffer


def _diou_elementwise(p0, p1, t0, t1, eps):
    """Per-element DIoU loss on lane/sublane-dense (rows, 128) tiles."""
    overlap = jnp.maximum(jnp.minimum(p1, t1) - jnp.maximum(p0, t0), 0.0)
    union = (p1 - p0) + (t1 - t0) - overlap + eps
    ious = overlap / union
    enclose = jnp.maximum(jnp.maximum(p1, t1) - jnp.minimum(p0, t0), 0.0)
    c2 = enclose * enclose + eps
    dc = (t0 + t1) * 0.5 - (p0 + p1) * 0.5
    rho2 = dc * dc
    return 1.0 - (ious - rho2 / c2)


def _diou_none_kernel(p0_ref, p1_ref, t0_ref, t1_ref, *rest, eps):
    """reduction='none': write per-element (weighted) loss tiles."""
    if len(rest) == 2:
        w_ref, out_ref = rest
    else:
        (out_ref,) = rest
        w_ref = None
    loss = _diou_elementwise(p0_ref[...], p1_ref[...], t0_ref[...], t1_ref[...], eps)
    if w_ref is not None:
        loss = loss * w_ref[...]
    out_ref[...] = loss


def _diou_reduce_kernel(n_ref, p0_ref, p1_ref, t0_ref, t1_ref, *rest,
                        eps, tile_rows):
    """reduction='sum'/'mean': write per-block (8, 128) partial sums only."""
    if len(rest) == 2:
        w_ref, psum_ref = rest
    else:
        (psum_ref,) = rest
        w_ref = None

    loss = _diou_elementwise(p0_ref[...], p1_ref[...], t0_ref[...], t1_ref[...], eps)

    # Mask the padded tail using the global flat element index (built in-kernel
    # from the scalar-prefetched n, so no wmask stream is needed).
    row_ids = jax.lax.broadcasted_iota(jnp.int32, loss.shape, 0)
    col_ids = jax.lax.broadcasted_iota(jnp.int32, loss.shape, 1)
    flat = (pl.program_id(0) * tile_rows + row_ids) * _LANES + col_ids
    loss = jnp.where(flat < n_ref[0], loss, 0.0)

    if w_ref is not None:
        loss = loss * w_ref[...]

    # (tile_rows, 128) -> (8, 128): sum whole (8, 128) vreg groups (pure VALU
    # adds, no cross-lane work); final scalar reduction happens in the wrapper.
    psum_ref[...] = loss.reshape(tile_rows // 8, 8, _LANES).sum(axis=0)


def _layout(n, max_tile_rows):
    """Choose padded size / tile rows / number of grid blocks."""
    assert max_tile_rows % 8 == 0
    block_elems = max_tile_rows * _LANES
    n_eff = max(n, 1)
    n_pad_min = ((n_eff + (8 * _LANES) - 1) // (8 * _LANES)) * (8 * _LANES)
    if n_pad_min <= block_elems:
        # Small n: single grid step (minimize fixed per-step overhead).
        n_pad = n_pad_min
        tile_rows = n_pad // _LANES
        num_blocks = 1
    else:
        n_pad = ((n_eff + block_elems - 1) // block_elems) * block_elems
        tile_rows = max_tile_rows
        num_blocks = n_pad // block_elems
    return n_pad, tile_rows, num_blocks


def diou_1d_loss(pred, target, weight=None, avg_factor=None,
                 reduction='mean', reduction_override=None,
                 eps=_EPS_DEFAULT, loss_weight=1.0,
                 max_tile_rows=_TILE_ROWS_MAX):
    """JAX/Pallas equivalent of DIoU1DLoss.forward.

    pred, target: (n, 2) float arrays of (start, end) segments.
    weight: optional (n,) or (n, 2) float weights.
    """
    assert reduction_override in (None, 'none', 'mean', 'sum')
    reduction = reduction_override if reduction_override else reduction

    pred = jnp.asarray(pred, jnp.float32)
    target = jnp.asarray(target, jnp.float32)
    n = pred.shape[0]

    if weight is not None:
        weight = jnp.asarray(weight, jnp.float32)
        if weight.ndim > 1:
            weight = weight.mean(-1)        # matches module: weight.mean(-1)
    # TODO(synk): the torch module's data-dependent early return
    # `if weight is not None and not torch.any(weight > 0): return (pred*weight).sum()`
    # needs a host sync in JAX; it is not replicated here.

    n_pad, tile_rows, num_blocks = _layout(n, max_tile_rows)
    rows = n_pad // _LANES

    def to_tiles(col):
        # 1-D pad + reshape: hands the kernel a lane/sublane-dense (rows, 128)
        # layout without materializing a (2, n) transpose.
        return jnp.pad(col, (0, n_pad - n)).reshape(rows, _LANES)

    streams = [to_tiles(pred[:, 0]), to_tiles(pred[:, 1]),
               to_tiles(target[:, 0]), to_tiles(target[:, 1])]
    if weight is not None:
        streams.append(to_tiles(weight))

    if reduction == 'none':
        tile_spec = pl.BlockSpec((tile_rows, _LANES), lambda i: (i, 0))
        out = pl.pallas_call(
            functools.partial(_diou_none_kernel, eps=eps),
            out_shape=jax.ShapeDtypeStruct((rows, _LANES), jnp.float32),
            grid=(num_blocks,),
            in_specs=[tile_spec] * len(streams),
            out_specs=tile_spec,
            compiler_params=pltpu.CompilerParams(
                dimension_semantics=("parallel",)),
        )(*streams)
        return loss_weight * out.reshape(-1)[:n]

    # 'sum' / 'mean': partial sums only -> no per-element HBM writeback.
    tile_spec = pl.BlockSpec((tile_rows, _LANES), lambda i, n_sm: (i, 0))
    psum_spec = pl.BlockSpec((8, _LANES), lambda i, n_sm: (i, 0))
    n_arr = jnp.array([n], jnp.int32)

    psums = pl.pallas_call(
        functools.partial(_diou_reduce_kernel, eps=eps, tile_rows=tile_rows),
        out_shape=jax.ShapeDtypeStruct((num_blocks * 8, _LANES), jnp.float32),
        grid_spec=pltpu.PrefetchScalarGridSpec(
            num_scalar_prefetch=1,
            grid=(num_blocks,),
            in_specs=[tile_spec] * len(streams),
            out_specs=psum_spec,
        ),
        compiler_params=pltpu.CompilerParams(
            dimension_semantics=("parallel",)),
    )(n_arr, *streams)

    loss_sum = jnp.sum(psums)

    if reduction == 'sum':
        out = loss_sum
    else:  # 'mean'
        if avg_factor is not None:
            out = loss_sum / avg_factor
        else:
            out = loss_sum / jnp.maximum(n, 1)   # guard empty input
    return loss_weight * out


def _diou_ref(pred, target, eps=_EPS_DEFAULT):
    """Pure-JAX reference of the per-element loss, for sanity checking."""
    p0, p1 = pred[:, 0], pred[:, 1]
    t0, t1 = target[:, 0], target[:, 1]
    overlap = jnp.clip(jnp.minimum(p1, t1) - jnp.maximum(p0, t0), 0.0)
    union = (p1 - p0) + (t1 - t0) - overlap + eps
    ious = overlap / union
    ei = jnp.clip(jnp.maximum(p1, t1) - jnp.minimum(p0, t0), 0.0)
    c2 = ei ** 2 + eps
    rho2 = ((t0 + t1) * 0.5 - (p0 + p1) * 0.5) ** 2
    return 1.0 - (ious - rho2 / c2)


if __name__ == "__main__":
    key = jax.random.PRNGKey(0)
    k1, k2, k3, k4, k5, k6, k7, k8, k9 = jax.random.split(key, 9)

    # --- small case (n=8), matches typical detection-loss shapes ---
    n = 8
    ps = jax.random.uniform(k1, (n,), jnp.float32, 0.0, 10.0)
    pl_len = jax.random.uniform(k2, (n,), jnp.float32, 0.5, 5.0)
    ts = jax.random.uniform(k3, (n,), jnp.float32, 0.0, 10.0)
    tl_len = jax.random.uniform(k4, (n,), jnp.float32, 0.5, 5.0)
    pred = jnp.stack([ps, ps + pl_len], axis=-1)      # (n, 2)
    target = jnp.stack([ts, ts + tl_len], axis=-1)    # (n, 2)
    w = jax.random.uniform(k5, (n,), jnp.float32, 0.1, 1.0)

    out_none = diou_1d_loss(pred, target, reduction='none')
    out_mean = diou_1d_loss(pred, target, reduction='mean')
    out_sum = diou_1d_loss(pred, target, reduction='sum')
    out_wmean = diou_1d_loss(pred, target, weight=w, reduction='mean')
    jax.block_until_ready((out_none, out_mean, out_sum, out_wmean))

    ref = _diou_ref(pred, target)
    assert jnp.allclose(out_none, ref, atol=1e-5, rtol=1e-5)
    assert jnp.allclose(out_mean, ref.mean(), atol=1e-5, rtol=1e-5)
    assert jnp.allclose(out_sum, ref.sum(), atol=1e-5, rtol=1e-5)
    assert jnp.allclose(out_wmean, (ref * w).mean(), atol=1e-5, rtol=1e-5)

    # --- multi-block grid path (small max_tile_rows to exercise tiling) ---
    m = 300
    ps2 = jax.random.uniform(k6, (m,), jnp.float32, 0.0, 10.0)
    pl2 = jax.random.uniform(k7, (m,), jnp.float32, 0.5, 5.0)
    ts2 = jax.random.uniform(k8, (m,), jnp.float32, 0.0, 10.0)
    tl2 = jax.random.uniform(k9, (m,), jnp.float32, 0.5, 5.0)
    pred2 = jnp.stack([ps2, ps2 + pl2], axis=-1)
    target2 = jnp.stack([ts2, ts2 + tl2], axis=-1)

    out2_mean = diou_1d_loss(pred2, target2, reduction='mean', max_tile_rows=8)
    out2_none = diou_1d_loss(pred2, target2, reduction='none', max_tile_rows=8)
    jax.block_until_ready((out2_mean, out2_none))

    ref2 = _diou_ref(pred2, target2)
    assert jnp.allclose(out2_none, ref2, atol=1e-5, rtol=1e-5)
    assert jnp.allclose(out2_mean, ref2.mean(), atol=1e-5, rtol=1e-5)

    print("KERNEL_OK")
</pallas_src>

<mosaic_0001>
module attributes {stable_mosaic.version = 11 : i64} {
  func.func @_diou_none_kernel(%arg0: i32, %arg1: memref<8x128xf32, #tpu.memory_space<vmem>>, %arg2: memref<8x128xf32, #tpu.memory_space<vmem>>, %arg3: memref<8x128xf32, #tpu.memory_space<vmem>>, %arg4: memref<8x128xf32, #tpu.memory_space<vmem>>, %arg5: memref<8x128xf32, #tpu.memory_space<vmem>>) attributes {dimension_semantics = [#tpu.dimension_semantics<parallel>], iteration_bounds = array<i64: 1>, scalar_prefetch = 0 : i64, scratch_operands = 0 : i64, tpu.core_type = #tpu.core_type<tc>, window_params = [{transform_indices = @transform_0, window_bounds = array<i64: 8, 128>}, {transform_indices = @transform_1, window_bounds = array<i64: 8, 128>}, {transform_indices = @transform_2, window_bounds = array<i64: 8, 128>}, {transform_indices = @transform_3, window_bounds = array<i64: 8, 128>}, {transform_indices = @transform_4, window_bounds = array<i64: 8, 128>}]} {
    %c0 = arith.constant 0 : index
    %c0_0 = arith.constant 0 : index
    %0 = vector.load %arg1[%c0, %c0_0] : memref<8x128xf32, #tpu.memory_space<vmem>>, vector<8x128xf32>
    %c0_1 = arith.constant 0 : index
    %c0_2 = arith.constant 0 : index
    %1 = vector.load %arg2[%c0_1, %c0_2] : memref<8x128xf32, #tpu.memory_space<vmem>>, vector<8x128xf32>
    %c0_3 = arith.constant 0 : index
    %c0_4 = arith.constant 0 : index
    %2 = vector.load %arg3[%c0_3, %c0_4] : memref<8x128xf32, #tpu.memory_space<vmem>>, vector<8x128xf32>
    %c0_5 = arith.constant 0 : index
    %c0_6 = arith.constant 0 : index
    %3 = vector.load %arg4[%c0_5, %c0_6] : memref<8x128xf32, #tpu.memory_space<vmem>>, vector<8x128xf32>
    %4 = arith.minimumf %1, %3 : vector<8x128xf32>
    %5 = arith.maximumf %0, %2 : vector<8x128xf32>
    %6 = arith.subf %4, %5 : vector<8x128xf32>
    %cst = arith.constant 0.000000e+00 : f32
    %7 = vector.broadcast %cst : f32 to vector<8x128xf32>
    %8 = arith.maximumf %6, %7 : vector<8x128xf32>
    %9 = arith.subf %1, %0 : vector<8x128xf32>
    %10 = arith.subf %3, %2 : vector<8x128xf32>
    %11 = arith.addf %9, %10 : vector<8x128xf32>
    %12 = arith.subf %11, %8 : vector<8x128xf32>
    %cst_7 = arith.constant 9.99999997E-7 : f32
    %13 = vector.broadcast %cst_7 : f32 to vector<8x128xf32>
    %14 = arith.addf %12, %13 : vector<8x128xf32>
    %15 = arith.divf %8, %14 : vector<8x128xf32>
    %16 = arith.maximumf %1, %3 : vector<8x128xf32>
    %17 = arith.minimumf %0, %2 : vector<8x128xf32>
    %18 = arith.subf %16, %17 : vector<8x128xf32>
    %cst_8 = arith.constant 0.000000e+00 : f32
    %19 = vector.broadcast %cst_8 : f32 to vector<8x128xf32>
    %20 = arith.maximumf %18, %19 : vector<8x128xf32>
    %21 = arith.mulf %20, %20 : vector<8x128xf32>
    %cst_9 = arith.constant 9.99999997E-7 : f32
    %22 = vector.broadcast %cst_9 : f32 to vector<8x128xf32>
    %23 = arith.addf %21, %22 : vector<8x128xf32>
    %24 = arith.addf %2, %3 : vector<8x128xf32>
    %cst_10 = arith.constant 5.000000e-01 : f32
    %25 = vector.broadcast %cst_10 : f32 to vector<8x128xf32>
    %26 = arith.mulf %24, %25 : vector<8x128xf32>
    %27 = arith.addf %0, %1 : vector<8x128xf32>
    %cst_11 = arith.constant 5.000000e-01 : f32
    %28 = vector.broadcast %cst_11 : f32 to vector<8x128xf32>
    %29 = arith.mulf %27, %28 : vector<8x128xf32>
    %30 = arith.subf %26, %29 : vector<8x128xf32>
    %31 = arith.mulf %30, %30 : vector<8x128xf32>
    %32 = arith.divf %31, %23 : vector<8x128xf32>
    %33 = arith.subf %15, %32 : vector<8x128xf32>
    %cst_12 = arith.constant 1.000000e+00 : f32
    %34 = vector.broadcast %cst_12 : f32 to vector<8x128xf32>
    %35 = arith.subf %34, %33 : vector<8x128xf32>
    %c0_13 = arith.constant 0 : index
    %c0_14 = arith.constant 0 : index
    %36 = vector.load %arg5[%c0_13, %c0_14] : memref<8x128xf32, #tpu.memory_space<vmem>>, vector<8x128xf32>
    tpu.vector_store %arg5[%c0_13, %c0_14], %35 {strides = array<i32>} : memref<8x128xf32, #tpu.memory_space<vmem>>, vector<8x128xf32>,
    return
  }
  func.func @transform_0(%arg0: i32) -> (i32, i32) {
    %c0_i32 = arith.constant 0 : i32
    %c0_i32_0 = arith.constant 0 : i32
    return %arg0, %c0_i32 : i32, i32
  }
  func.func @transform_1(%arg0: i32) -> (i32, i32) {
    %c0_i32 = arith.constant 0 : i32
    %c0_i32_0 = arith.constant 0 : i32
    return %arg0, %c0_i32 : i32, i32
  }
  func.func @transform_2(%arg0: i32) -> (i32, i32) {
    %c0_i32 = arith.constant 0 : i32
    %c0_i32_0 = arith.constant 0 : i32
    return %arg0, %c0_i32 : i32, i32
  }
  func.func @transform_3(%arg0: i32) -> (i32, i32) {
    %c0_i32 = arith.constant 0 : i32
    %c0_i32_0 = arith.constant 0 : i32
    return %arg0, %c0_i32 : i32, i32
  }
  func.func @transform_4(%arg0: i32) -> (i32, i32) {
    %c0_i32 = arith.constant 0 : i32
    %c0_i32_0 = arith.constant 0 : i32
    return %arg0, %c0_i32 : i32, i32
  }
}

</mosaic_0001>

<llo_original>
// kernel: tpu_custom_call.1
$region0: #{tpu_custom_call.1}
  #allocation0 [shape = 'u32[]', space=smem, size = 0x4, offset = 0x4, fixed_abs, tag = 'smem constant byte address 0x4 - core index']
  #allocation1 [shape = 'u32[72,128]{1,0:T(1,128)}', space=vmem, size = 0x9000, scoped, tag = 'internal scratch']
  %s0 = inlined_call_operand.hbm [shape: f32[8,128], index: 0, kind: input, shape index: {}]
  %s1 = inlined_call_operand.hbm [shape: f32[8,128], index: 1, kind: input, shape index: {}]
  %s2 = inlined_call_operand.hbm [shape: f32[8,128], index: 2, kind: input, shape index: {}]
  %s3 = inlined_call_operand.hbm [shape: f32[8,128], index: 3, kind: input, shape index: {}]
  %s4 = inlined_call_operand.hbm [shape: f32[8,128], index: 4, kind: output, shape index: {}]
  %s5 = sld [smem:[#allocation0]]
  $region42: #{tpu_custom_call.1} parent=0
    _
  %s7 = ssub.s32 1, %s5
  %s8 = scalar_select 0, %s7, %s5
  $region1: #{tpu_custom_call.1} parent=0
    #allocation2 [shape = 'u8[4096]{0}', space=vmem, size = 0x1000, scoped, tag = 'input window, operand 0, single buffered']
    #allocation3 [shape = 's32[1]{0}', space=sflag, size = 0x4, scoped, tag = 'scoped memory for tpu_custom_call.1']
    #allocation4 [shape = 's32[1]{0}', space=sflag, size = 0x4, scoped, tag = 'scoped memory for tpu_custom_call.1']
    #allocation5 [shape = 'u8[4096]{0}', space=vmem, size = 0x1000, scoped, tag = 'input window, operand 1, single buffered']
    #allocation6 [shape = 's32[1]{0}', space=sflag, size = 0x4, scoped, tag = 'scoped memory for tpu_custom_call.1']
    #allocation7 [shape = 'u8[4096]{0}', space=vmem, size = 0x1000, scoped, tag = 'input window, operand 2, single buffered']
    #allocation8 [shape = 'u8[4096]{0}', space=vmem, size = 0x1000, scoped, tag = 'input window, operand 3, single buffered']
    #allocation9 [shape = 's32[1]{0}', space=sflag, size = 0x4, scoped, tag = 'scoped memory for tpu_custom_call.1']
    #allocation10 [shape = 'u8[4096]{0}', space=vmem, size = 0x1000, scoped, tag = 'output window, operand 0, single buffered']
    %9 = vsyncpa [#allocation3], 0
    %10 = vsyncpa [#allocation6], 0
    %11 = vsyncpa [#allocation9], 0
    %12 = vsyncpa [#allocation4], 0
    // Predicated region
    $region2: #{tpu_custom_call.1} parent=1 // pred_check
      _
    $region3: #{tpu_custom_call.1} parent=1 // pred_check_branch
      %14 = sbr.rel (0) target = $region5
    $region4: #{tpu_custom_call.1} parent=1 // pred_region
      %16 = vsyncadd [#allocation3], 0
      %s18 = sshll.u32 %s0, 4
      %s19 = int_to_ptr.hbm [resolvable:$true] %s18
      %s20 = sshll.u32 [#allocation2], 4
      %s21 = int_to_ptr.vmem [resolvable:$true] %s20
      %23 = dma.hbm_to_vmem [thread:$0]  %s19, 128, %s21, [#allocation3]
    $region5: #{tpu_custom_call.1} parent=1 // pred_fallthru
      _
    // Predicated region
    $region6: #{tpu_custom_call.1} parent=1 // pred_check
      _
    $region7: #{tpu_custom_call.1} parent=1 // pred_check_branch
      %25 = sbr.rel (0) target = $region9
    $region8: #{tpu_custom_call.1} parent=1 // pred_region
      %27 = vsyncadd [#allocation6], 0
      %s29 = sshll.u32 %s1, 4
      %s30 = int_to_ptr.hbm [resolvable:$true] %s29
      %s31 = sshll.u32 [#allocation5], 4
      %s32 = int_to_ptr.vmem [resolvable:$true] %s31
      %34 = dma.hbm_to_vmem [thread:$0]  %s30, 128, %s32, [#allocation6]
    $region9: #{tpu_custom_call.1} parent=1 // pred_fallthru
      _
    // Predicated region
    $region10: #{tpu_custom_call.1} parent=1 // pred_check
      _
    $region11: #{tpu_custom_call.1} parent=1 // pred_check_branch
      %36 = sbr.rel (0) target = $region13
    $region12: #{tpu_custom_call.1} parent=1 // pred_region
      %38 = vsyncadd [#allocation6], 0
      %s40 = sshll.u32 %s2, 4
      %s41 = int_to_ptr.hbm [resolvable:$true] %s40
      %s42 = sshll.u32 [#allocation7], 4
      %s43 = int_to_ptr.vmem [resolvable:$true] %s42
      %45 = dma.hbm_to_vmem [thread:$0]  %s41, 128, %s43, [#allocation6]
    $region13: #{tpu_custom_call.1} parent=1 // pred_fallthru
      _
    // Predicated region
    $region14: #{tpu_custom_call.1} parent=1 // pred_check
      _
    $region15: #{tpu_custom_call.1} parent=1 // pred_check_branch
      %47 = sbr.rel (0) target = $region17
    $region16: #{tpu_custom_call.1} parent=1 // pred_region
      %49 = vsyncadd [#allocation9], 0
      %s51 = sshll.u32 %s3, 4
      %s52 = int_to_ptr.hbm [resolvable:$true] %s51
      %s53 = sshll.u32 [#allocation8], 4
      %s54 = int_to_ptr.vmem [resolvable:$true] %s53
      %56 = dma.hbm_to_vmem [thread:$0]  %s52, 128, %s54, [#allocation9]
    $region17: #{tpu_custom_call.1} parent=1 // pred_fallthru
      _
    // Predicated region
    $region18: #{tpu_custom_call.1} parent=1 // pred_check
      _
    $region19: #{tpu_custom_call.1} parent=1 // pred_check_branch
      %58 = sbr.rel (0) target = $region21
    $region20: #{tpu_custom_call.1} parent=1 // pred_region
      %60 = dma.done [#allocation3], 128
    $region21: #{tpu_custom_call.1} parent=1 // pred_fallthru
      _
    // Predicated region
    $region22: #{tpu_custom_call.1} parent=1 // pred_check
      _
    $region23: #{tpu_custom_call.1} parent=1 // pred_check_branch
      %62 = sbr.rel (0) target = $region25
    $region24: #{tpu_custom_call.1} parent=1 // pred_region
      %64 = dma.done [#allocation6], 128
    $region25: #{tpu_custom_call.1} parent=1 // pred_fallthru
      _
    // Predicated region
    $region26: #{tpu_custom_call.1} parent=1 // pred_check
      _
    $region27: #{tpu_custom_call.1} parent=1 // pred_check_branch
      %66 = sbr.rel (0) target = $region29
    $region28: #{tpu_custom_call.1} parent=1 // pred_region
      %68 = dma.done [#allocation6], 128
    $region29: #{tpu_custom_call.1} parent=1 // pred_fallthru
      _
    // Predicated region
    $region30: #{tpu_custom_call.1} parent=1 // pred_check
      _
    $region31: #{tpu_custom_call.1} parent=1 // pred_check_branch
      %70 = sbr.rel (0) target = $region33
    $region32: #{tpu_custom_call.1} parent=1 // pred_region
      %72 = dma.done [#allocation9], 128
    $region33: #{tpu_custom_call.1} parent=1 // pred_fallthru
      _
    %v73 = vld [vmem:[#allocation2] sm:$0xff]
    %v74 = vld [vmem:[#allocation5] sm:$0xff]
    %v75 = vld [vmem:[#allocation7] sm:$0xff]
    %v76 = vld [vmem:[#allocation8] sm:$0xff]
    %v77 = vmin.f32 %v74, %v76
    %v78 = vmax.f32 %v73, %v75
    %v79 = vsub.f32 %v77, %v78
    %v80 = vmax.f32 %v79, 0.0
    %v81 = vsub.f32 %v74, %v73
    %v82 = vsub.f32 %v76, %v75
    %v83 = vadd.f32 %v81, %v82
    %v84 = vsub.f32 %v83, %v80
    %v85 = vadd.f32 %v84, 1e-06
    %v86 = vrcp.pop %v85
    %v87 = vmul.f32 %v85, %v86
    %v88 = vsub.f32 1.0, %v87
    %v89 = vmul.f32 %v86, %v88
    %v90 = vadd.f32 %v86, %v89
    %vm91 = vweird.f32 %v85
    %vm92 = vweird.f32 %v86
    %vm93 = vmor %vm91, %vm92
    %v94 = vsel %vm93, %v86, %v90
    %v95 = vand.u32 2147483647, %v85
    %vm96 = vcmp.eq.f32.partialorder %v95, 8.507059e+37
    %v97 = vand.u32 %v85, 2147483648
    %v98 = vor.u32 1.1754944e-38, %v97
    %v99 = vsel %vm96, %v98, %v94
    %v100 = vmul.f32 %v80, %v99
    %v101 = vmax.f32 %v74, %v76
    %v102 = vmin.f32 %v73, %v75
    %v103 = vsub.f32 %v101, %v102
    %v104 = vmax.f32 %v103, 0.0
    %v105 = vmul.f32 %v104, %v104
    %v106 = vadd.f32 %v105, 1e-06
    %v107 = vadd.f32 %v75, %v76
    %v108 = vmul.f32 %v107, 0.5
    %v109 = vadd.f32 %v73, %v74
    %v110 = vmul.f32 %v109, 0.5
    %v111 = vsub.f32 %v108, %v110
    %v112 = vmul.f32 %v111, %v111
    %v113 = vrcp.pop %v106
    %v114 = vmul.f32 %v106, %v113
    %v115 = vsub.f32 1.0, %v114
    %v116 = vmul.f32 %v113, %v115
    %v117 = vadd.f32 %v113, %v116
    %vm118 = vweird.f32 %v106
    %vm119 = vweird.f32 %v113
    %vm120 = vmor %vm118, %vm119
    %v121 = vsel %vm120, %v113, %v117
    %v122 = vand.u32 2147483647, %v106
    %vm123 = vcmp.eq.f32.partialorder %v122, 8.507059e+37
    %v124 = vand.u32 %v106, 2147483648
    %v125 = vor.u32 1.1754944e-38, %v124
    %v126 = vsel %vm123, %v125, %v121
    %v127 = vmul.f32 %v112, %v126
    %v128 = vsub.f32 %v100, %v127
    %v129 = vsub.f32 1.0, %v128
    %130 = vst [vmem:[#allocation10] sm:$0xff] %v129
    // Predicated region
    $region34: #{tpu_custom_call.1} parent=1 // pred_check
      _
    $region35: #{tpu_custom_call.1} parent=1 // pred_check_branch
      %132 = sbr.rel (0) target = $region37
    $region36: #{tpu_custom_call.1} parent=1 // pred_region
      %134 = vsyncadd [#allocation4], 0
      %s136 = sshll.u32 [#allocation10], 4
      %s137 = int_to_ptr.vmem [resolvable:$true] %s136
      %s138 = sshll.u32 %s4, 4
      %s139 = int_to_ptr.hbm [resolvable:$true] %s138
      %141 = dma.vmem_to_hbm [thread:$0]  %s137, 128, %s139, [#allocation4]
    $region37: #{tpu_custom_call.1} parent=1 // pred_fallthru
      _
    // Predicated region
    $region38: #{tpu_custom_call.1} parent=1 // pred_check
      _
    $region39: #{tpu_custom_call.1} parent=1 // pred_check_branch
      %143 = sbr.rel (0) target = $region41
    $region40: #{tpu_custom_call.1} parent=1 // pred_region
      %145 = dma.done [#allocation4], 128
    $region41: #{tpu_custom_call.1} parent=1 // pred_fallthru
      _
    %146 = vsyncpa [#allocation3], 1
    %147 = vsyncpa [#allocation6], 1
    %148 = vsyncpa [#allocation9], 1
    %149 = vsyncpa [#allocation4], 1

</llo_original>
